<compile_context>
chip_gen: v6e
topology: v6e:2x2x1
jax: 0.10.0
libtpu: 0.0.40
codegen_flags: <defaults>
</compile_context>

<pallas_src>
import jax
import jax.numpy as jnp
from jax.experimental import pallas as pl
from jax.experimental.pallas import tpu as pltpu


IN_DIM = 39
BOTTLENECK_DIM = 20
H1 = 32
H2 = 20


def ae_kernel(x_ref,
              w1_ref, b1_ref, w2_ref, b2_ref, w34_ref, b34_ref,
              w5_ref, b5_ref, w6_ref, b6_ref,
              out_ref):
    # x_ref: [IN_DIM, tm]  (features on sublanes, batch tile on lanes).
    # Weights are [out, in]; biases are [out, 1] columns (lane-broadcast).
    mm_dt = w1_ref.dtype          # f32 by default; bf16 when use_bf16=True
    h = x_ref[...].astype(jnp.float32)

    # --- encoder ---
    h = jnp.dot(w1_ref[...], h.astype(mm_dt),
                preferred_element_type=jnp.float32) + b1_ref[...]
    h = jnp.maximum(h, 0.0)
    h = jnp.dot(w2_ref[...], h.astype(mm_dt),
                preferred_element_type=jnp.float32) + b2_ref[...]
    h = jnp.maximum(h, 0.0)

    # --- fused bottleneck: encoder layer 3 (no ReLU) folded into decoder layer 4 ---
    h = jnp.dot(w34_ref[...], h.astype(mm_dt),
                preferred_element_type=jnp.float32) + b34_ref[...]
    h = jnp.maximum(h, 0.0)

    # --- decoder tail ---
    h = jnp.dot(w5_ref[...], h.astype(mm_dt),
                preferred_element_type=jnp.float32) + b5_ref[...]
    h = jnp.maximum(h, 0.0)
    y = jnp.dot(w6_ref[...], h.astype(mm_dt),
                preferred_element_type=jnp.float32) + b6_ref[...]

    out_ref[...] = y.astype(out_ref.dtype)


def _choose_tile(B, tm):
    """Pick a lane-tile: multiple of 128, capped so >= 2 grid steps exist."""
    if B <= 128:
        return B                       # single full-extent block is allowed
    # Keep at least 2 parallel grid steps so v7x's two TensorCores both get work.
    half = (B // 2 // 128) * 128
    if half >= 128:
        tm = min(tm, half)
    tm = max(128, (min(tm, B) // 128) * 128)
    return tm


def ae_forward_t(x_t, params, *, tm=2048, use_bf16=False):
    """Native entry point.  x_t: [IN_DIM, B] (batch on the lane axis).

    params: 6 tuples (W, b) in PyTorch layout: W [out, in], b [out, 1].
    Returns y_t: [IN_DIM, B] in x_t's dtype.
    """
    D, B = x_t.shape
    assert D == IN_DIM

    (w1, b1), (w2, b2), (w3, b3), (w4, b4), (w5, b5), (w6, b6) = params

    # Algebraic fusion of the ReLU-free layer-3 / layer-4 pair (transposed form):
    #   W4 @ (W3 @ h + b3) + b4  ==  (W4 @ W3) @ h + (W4 @ b3 + b4)
    w34 = jnp.dot(w4, w3, preferred_element_type=jnp.float32)
    b34 = jnp.dot(w4, b3, preferred_element_type=jnp.float32) + b4

    weights = [w1, w2, w34, w5, w6]
    biases = [b1, b2, b34, b5, b6]
    if use_bf16:
        weights = [w.astype(jnp.bfloat16) for w in weights]  # MXU operands only
    # Biases stay f32 (elementwise adds on the VPU).

    flat = []
    for w, b in zip(weights, biases):
        flat += [w, b]

    tile = _choose_tile(B, tm)
    grid_steps = pl.cdiv(B, tile)      # no padding: partial last block handled by Pallas

    # Weights/biases: full-array blocks with a constant index_map -> DMA'd once,
    # resident in VMEM for every grid step.
    def full_spec(arr):
        return pl.BlockSpec(arr.shape, lambda i: (0, 0))

    in_specs = [pl.BlockSpec((IN_DIM, tile), lambda i: (0, i))]
    in_specs += [full_spec(a) for a in flat]
    out_spec = pl.BlockSpec((IN_DIM, tile), lambda i: (0, i))

    # Advisory cost hint for XLA's scheduler.
    macs_per_row = IN_DIM * H1 + H1 * H2 + H2 * H2 + H2 * H1 + H1 * IN_DIM
    w_bytes = sum(int(a.size) * a.dtype.itemsize for a in flat)
    cost = pl.CostEstimate(
        flops=2 * B * macs_per_row,
        transcendentals=0,
        bytes_accessed=B * IN_DIM * (x_t.dtype.itemsize + jnp.dtype(x_t.dtype).itemsize)
        + w_bytes,
    )

    return pl.pallas_call(
        ae_kernel,
        out_shape=jax.ShapeDtypeStruct((IN_DIM, B), x_t.dtype),
        grid_spec=pltpu.PrefetchScalarGridSpec(
            num_scalar_prefetch=0,
            grid=(grid_steps,),
            in_specs=in_specs,
            out_specs=out_spec,
        ),
        compiler_params=pltpu.CompilerParams(
            dimension_semantics=("parallel",)),
        cost_estimate=cost,
    )(x_t, *flat)


def ae_forward(x, params, *, tm=2048, use_bf16=False):
    """Convenience wrapper: x [B, IN_DIM] -> y [B, IN_DIM].

    Transposes around the [D, B]-native kernel.  For production keep the
    producer/consumer in [D, B] layout and call ae_forward_t directly to
    avoid the extra HBM transpose passes.
    """
    y_t = ae_forward_t(jnp.transpose(x), params, tm=tm, use_bf16=use_bf16)
    return jnp.transpose(y_t)


def init_linear(key, fan_in, fan_out):
    """PyTorch nn.Linear-style init; W stored [out, in], b stored [out, 1]."""
    kw, kb = jax.random.split(key)
    bound = 1.0 / jnp.sqrt(jnp.float32(fan_in))
    w = jax.random.uniform(kw, (fan_out, fan_in), jnp.float32, -bound, bound)
    b = jax.random.uniform(kb, (fan_out, 1), jnp.float32, -bound, bound)
    return w, b


def make_params(key):
    dims = [(IN_DIM, H1), (H1, H2), (H2, BOTTLENECK_DIM),
            (BOTTLENECK_DIM, H2), (H2, H1), (H1, IN_DIM)]
    keys = jax.random.split(key, len(dims))
    return [init_linear(k, fi, fo) for k, (fi, fo) in zip(keys, dims)]


def ae_reference(x, params):
    """Pure-JAX reference, x [B, IN_DIM], params in [out,in]/[out,1] layout."""
    h = x
    for idx, (w, b) in enumerate(params):
        h = h @ w.T + b[:, 0]
        # ReLU after every layer except layer 3 (bottleneck out) and layer 6 (final out)
        if idx not in (2, 5):
            h = jnp.maximum(h, 0.0)
    return h


if __name__ == "__main__":
    key = jax.random.PRNGKey(0)
    kx, kp = jax.random.split(key)

    # Small batch, deliberately NOT a multiple of 128, to exercise the
    # partial-boundary-block path (no padding copies in the wrapper).
    B = 300
    x = jax.random.normal(kx, (B, IN_DIM), jnp.float32)
    params = make_params(kp)

    ref = ae_reference(x, params)

    # f32 path: must match the reference tightly (only fp reassociation from
    # the W4@W3 pre-fusion differs).
    out_f32 = jax.block_until_ready(ae_forward(x, params, use_bf16=False))
    assert out_f32.shape == (B, IN_DIM)
    assert jnp.allclose(out_f32, ref, atol=1e-4, rtol=1e-4), "f32 path mismatch vs reference"

    # Optional bf16-operand path: loose tolerance.
    out_bf16 = jax.block_until_ready(ae_forward(x, params, use_bf16=True))
    assert out_bf16.shape == (B, IN_DIM)
    assert jnp.allclose(out_bf16, ref, atol=1e-1, rtol=5e-2), "bf16 path mismatch vs reference"

    print("KERNEL_OK")
</pallas_src>

<mosaic_0001>
module attributes {stable_mosaic.version = 11 : i64} {
  func.func @ae_kernel(%arg0: i32, %arg1: memref<39x128xf32, #tpu.memory_space<vmem>>, %arg2: memref<32x39xf32, #tpu.memory_space<vmem>>, %arg3: memref<32x1xf32, #tpu.memory_space<vmem>>, %arg4: memref<20x32xf32, #tpu.memory_space<vmem>>, %arg5: memref<20x1xf32, #tpu.memory_space<vmem>>, %arg6: memref<20x20xf32, #tpu.memory_space<vmem>>, %arg7: memref<20x1xf32, #tpu.memory_space<vmem>>, %arg8: memref<32x20xf32, #tpu.memory_space<vmem>>, %arg9: memref<32x1xf32, #tpu.memory_space<vmem>>, %arg10: memref<39x32xf32, #tpu.memory_space<vmem>>, %arg11: memref<39x1xf32, #tpu.memory_space<vmem>>, %arg12: memref<39x128xf32, #tpu.memory_space<vmem>>) attributes {dimension_semantics = [#tpu.dimension_semantics<parallel>], iteration_bounds = array<i64: 3>, scalar_prefetch = 0 : i64, scratch_operands = 0 : i64, tpu.core_type = #tpu.core_type<tc>, window_params = [{transform_indices = @transform_0, window_bounds = array<i64: 39, 128>}, {pipeline_mode = #tpu.pipeline_mode<synchronous>, transform_indices = @transform_1, window_bounds = array<i64: 32, 39>}, {pipeline_mode = #tpu.pipeline_mode<synchronous>, transform_indices = @transform_2, window_bounds = array<i64: 32, 1>}, {pipeline_mode = #tpu.pipeline_mode<synchronous>, transform_indices = @transform_3, window_bounds = array<i64: 20, 32>}, {pipeline_mode = #tpu.pipeline_mode<synchronous>, transform_indices = @transform_4, window_bounds = array<i64: 20, 1>}, {pipeline_mode = #tpu.pipeline_mode<synchronous>, transform_indices = @transform_5, window_bounds = array<i64: 20, 20>}, {pipeline_mode = #tpu.pipeline_mode<synchronous>, transform_indices = @transform_6, window_bounds = array<i64: 20, 1>}, {pipeline_mode = #tpu.pipeline_mode<synchronous>, transform_indices = @transform_7, window_bounds = array<i64: 32, 20>}, {pipeline_mode = #tpu.pipeline_mode<synchronous>, transform_indices = @transform_8, window_bounds = array<i64: 32, 1>}, {pipeline_mode = #tpu.pipeline_mode<synchronous>, transform_indices = @transform_9, window_bounds = array<i64: 39, 32>}, {pipeline_mode = #tpu.pipeline_mode<synchronous>, transform_indices = @transform_10, window_bounds = array<i64: 39, 1>}, {transform_indices = @transform_11, window_bounds = array<i64: 39, 128>}]} {
    %c0 = arith.constant 0 : index
    %c0_0 = arith.constant 0 : index
    %0 = vector.load %arg1[%c0, %c0_0] : memref<39x128xf32, #tpu.memory_space<vmem>>, vector<39x128xf32>
    %c0_1 = arith.constant 0 : index
    %c0_2 = arith.constant 0 : index
    %1 = vector.load %arg2[%c0_1, %c0_2] : memref<32x39xf32, #tpu.memory_space<vmem>>, vector<32x39xf32>
    %cst = arith.constant dense<0.000000e+00> : vector<32x128xf32>
    %2 = tpu.matmul %1, %0, %cst {dimension_numbers = #tpu.dot_dimension_numbers<[1], [0], [0], [1], [0, 0, 1, 1], [], []>} : vector<32x39xf32>, vector<39x128xf32>, vector<32x128xf32> -> vector<32x128xf32>
    %c0_3 = arith.constant 0 : index
    %c0_4 = arith.constant 0 : index
    %3 = vector.load %arg3[%c0_3, %c0_4] : memref<32x1xf32, #tpu.memory_space<vmem>>, vector<32x1xf32>
    %4 = vector.broadcast %3 : vector<32x1xf32> to vector<32x128xf32>
    %5 = arith.addf %2, %4 : vector<32x128xf32>
    %cst_5 = arith.constant 0.000000e+00 : f32
    %6 = vector.broadcast %cst_5 : f32 to vector<32x128xf32>
    %7 = arith.maximumf %5, %6 : vector<32x128xf32>
    %c0_6 = arith.constant 0 : index
    %c0_7 = arith.constant 0 : index
    %8 = vector.load %arg4[%c0_6, %c0_7] : memref<20x32xf32, #tpu.memory_space<vmem>>, vector<20x32xf32>
    %cst_8 = arith.constant dense<0.000000e+00> : vector<20x128xf32>
    %9 = tpu.matmul %8, %7, %cst_8 {dimension_numbers = #tpu.dot_dimension_numbers<[1], [0], [0], [1], [0, 0, 1, 1], [], []>} : vector<20x32xf32>, vector<32x128xf32>, vector<20x128xf32> -> vector<20x128xf32>
    %c0_9 = arith.constant 0 : index
    %c0_10 = arith.constant 0 : index
    %10 = vector.load %arg5[%c0_9, %c0_10] : memref<20x1xf32, #tpu.memory_space<vmem>>, vector<20x1xf32>
    %11 = vector.broadcast %10 : vector<20x1xf32> to vector<20x128xf32>
    %12 = arith.addf %9, %11 : vector<20x128xf32>
    %cst_11 = arith.constant 0.000000e+00 : f32
    %13 = vector.broadcast %cst_11 : f32 to vector<20x128xf32>
    %14 = arith.maximumf %12, %13 : vector<20x128xf32>
    %c0_12 = arith.constant 0 : index
    %c0_13 = arith.constant 0 : index
    %15 = vector.load %arg6[%c0_12, %c0_13] : memref<20x20xf32, #tpu.memory_space<vmem>>, vector<20x20xf32>
    %cst_14 = arith.constant dense<0.000000e+00> : vector<20x128xf32>
    %16 = tpu.matmul %15, %14, %cst_14 {dimension_numbers = #tpu.dot_dimension_numbers<[1], [0], [0], [1], [0, 0, 1, 1], [], []>} : vector<20x20xf32>, vector<20x128xf32>, vector<20x128xf32> -> vector<20x128xf32>
    %c0_15 = arith.constant 0 : index
    %c0_16 = arith.constant 0 : index
    %17 = vector.load %arg7[%c0_15, %c0_16] : memref<20x1xf32, #tpu.memory_space<vmem>>, vector<20x1xf32>
    %18 = vector.broadcast %17 : vector<20x1xf32> to vector<20x128xf32>
    %19 = arith.addf %16, %18 : vector<20x128xf32>
    %cst_17 = arith.constant 0.000000e+00 : f32
    %20 = vector.broadcast %cst_17 : f32 to vector<20x128xf32>
    %21 = arith.maximumf %19, %20 : vector<20x128xf32>
    %c0_18 = arith.constant 0 : index
    %c0_19 = arith.constant 0 : index
    %22 = vector.load %arg8[%c0_18, %c0_19] : memref<32x20xf32, #tpu.memory_space<vmem>>, vector<32x20xf32>
    %cst_20 = arith.constant dense<0.000000e+00> : vector<32x128xf32>
    %23 = tpu.matmul %22, %21, %cst_20 {dimension_numbers = #tpu.dot_dimension_numbers<[1], [0], [0], [1], [0, 0, 1, 1], [], []>} : vector<32x20xf32>, vector<20x128xf32>, vector<32x128xf32> -> vector<32x128xf32>
    %c0_21 = arith.constant 0 : index
    %c0_22 = arith.constant 0 : index
    %24 = vector.load %arg9[%c0_21, %c0_22] : memref<32x1xf32, #tpu.memory_space<vmem>>, vector<32x1xf32>
    %25 = vector.broadcast %24 : vector<32x1xf32> to vector<32x128xf32>
    %26 = arith.addf %23, %25 : vector<32x128xf32>
    %cst_23 = arith.constant 0.000000e+00 : f32
    %27 = vector.broadcast %cst_23 : f32 to vector<32x128xf32>
    %28 = arith.maximumf %26, %27 : vector<32x128xf32>
    %c0_24 = arith.constant 0 : index
    %c0_25 = arith.constant 0 : index
    %29 = vector.load %arg10[%c0_24, %c0_25] : memref<39x32xf32, #tpu.memory_space<vmem>>, vector<39x32xf32>
    %cst_26 = arith.constant dense<0.000000e+00> : vector<39x128xf32>
    %30 = tpu.matmul %29, %28, %cst_26 {dimension_numbers = #tpu.dot_dimension_numbers<[1], [0], [0], [1], [0, 0, 1, 1], [], []>} : vector<39x32xf32>, vector<32x128xf32>, vector<39x128xf32> -> vector<39x128xf32>
    %c0_27 = arith.constant 0 : index
    %c0_28 = arith.constant 0 : index
    %31 = vector.load %arg11[%c0_27, %c0_28] : memref<39x1xf32, #tpu.memory_space<vmem>>, vector<39x1xf32>
    %32 = vector.broadcast %31 : vector<39x1xf32> to vector<39x128xf32>
    %33 = arith.addf %30, %32 : vector<39x128xf32>
    %c0_29 = arith.constant 0 : index
    %c0_30 = arith.constant 0 : index
    %34 = vector.load %arg12[%c0_29, %c0_30] : memref<39x128xf32, #tpu.memory_space<vmem>>, vector<39x128xf32>
    tpu.vector_store %arg12[%c0_29, %c0_30], %33 {strides = array<i32>} : memref<39x128xf32, #tpu.memory_space<vmem>>, vector<39x128xf32>,
    return
  }
  func.func @transform_0(%arg0: i32) -> (i32, i32) {
    %c0_i32 = arith.constant 0 : i32
    %c0_i32_0 = arith.constant 0 : i32
    return %c0_i32, %arg0 : i32, i32
  }
  func.func @transform_1(%arg0: i32) -> (i32, i32) {
    %c0_i32 = arith.constant 0 : i32
    %c0_i32_0 = arith.constant 0 : i32
    %c0_i32_1 = arith.constant 0 : i32
    return %c0_i32, %c0_i32_0 : i32, i32
  }
  func.func @transform_2(%arg0: i32) -> (i32, i32) {
    %c0_i32 = arith.constant 0 : i32
    %c0_i32_0 = arith.constant 0 : i32
    %c0_i32_1 = arith.constant 0 : i32
    return %c0_i32, %c0_i32_0 : i32, i32
  }
  func.func @transform_3(%arg0: i32) -> (i32, i32) {
    %c0_i32 = arith.constant 0 : i32
    %c0_i32_0 = arith.constant 0 : i32
    %c0_i32_1 = arith.constant 0 : i32
    return %c0_i32, %c0_i32_0 : i32, i32
  }
  func.func @transform_4(%arg0: i32) -> (i32, i32) {
    %c0_i32 = arith.constant 0 : i32
    %c0_i32_0 = arith.constant 0 : i32
    %c0_i32_1 = arith.constant 0 : i32
    return %c0_i32, %c0_i32_0 : i32, i32
  }
  func.func @transform_5(%arg0: i32) -> (i32, i32) {
    %c0_i32 = arith.constant 0 : i32
    %c0_i32_0 = arith.constant 0 : i32
    %c0_i32_1 = arith.constant 0 : i32
    return %c0_i32, %c0_i32_0 : i32, i32
  }
  func.func @transform_6(%arg0: i32) -> (i32, i32) {
    %c0_i32 = arith.constant 0 : i32
    %c0_i32_0 = arith.constant 0 : i32
    %c0_i32_1 = arith.constant 0 : i32
    return %c0_i32, %c0_i32_0 : i32, i32
  }
  func.func @transform_7(%arg0: i32) -> (i32, i32) {
    %c0_i32 = arith.constant 0 : i32
    %c0_i32_0 = arith.constant 0 : i32
    %c0_i32_1 = arith.constant 0 : i32
    return %c0_i32, %c0_i32_0 : i32, i32
  }
  func.func @transform_8(%arg0: i32) -> (i32, i32) {
    %c0_i32 = arith.constant 0 : i32
    %c0_i32_0 = arith.constant 0 : i32
    %c0_i32_1 = arith.constant 0 : i32
    return %c0_i32, %c0_i32_0 : i32, i32
  }
  func.func @transform_9(%arg0: i32) -> (i32, i32) {
    %c0_i32 = arith.constant 0 : i32
    %c0_i32_0 = arith.constant 0 : i32
    %c0_i32_1 = arith.constant 0 : i32
    return %c0_i32, %c0_i32_0 : i32, i32
  }
  func.func @transform_10(%arg0: i32) -> (i32, i32) {
    %c0_i32 = arith.constant 0 : i32
    %c0_i32_0 = arith.constant 0 : i32
    %c0_i32_1 = arith.constant 0 : i32
    return %c0_i32, %c0_i32_0 : i32, i32
  }
  func.func @transform_11(%arg0: i32) -> (i32, i32) {
    %c0_i32 = arith.constant 0 : i32
    %c0_i32_0 = arith.constant 0 : i32
    return %c0_i32, %arg0 : i32, i32
  }
}

</mosaic_0001>

<llo_original>
// kernel: tpu_custom_call.1
$region0: #{tpu_custom_call.1}
  #allocation0 [shape = 'u32[]', space=smem, size = 0x4, offset = 0x4, fixed_abs, tag = 'smem constant byte address 0x4 - core index']
  #allocation1 [shape = 'u32[144,128]{1,0:T(1,128)}', space=vmem, size = 0x12000, scoped, tag = 'internal scratch']
  %s0 = inlined_call_operand.vmem [shape: f32[39,300], index: 0, kind: input, shape index: {}]
  %s1 = inlined_call_operand.vmem [shape: f32[32,39], index: 1, kind: input, shape index: {}]
  %s2 = inlined_call_operand.vmem [shape: f32[32,1], index: 2, kind: input, shape index: {}]
  %s3 = inlined_call_operand.vmem [shape: f32[20,32], index: 3, kind: input, shape index: {}]
  %s4 = inlined_call_operand.vmem [shape: f32[20,1], index: 4, kind: input, shape index: {}]
  %s5 = inlined_call_operand.vmem [shape: f32[20,20], index: 5, kind: input, shape index: {}]
  %s6 = inlined_call_operand.vmem [shape: f32[20,1], index: 6, kind: input, shape index: {}]
  %s7 = inlined_call_operand.vmem [shape: f32[32,20], index: 7, kind: input, shape index: {}]
  %s8 = inlined_call_operand.vmem [shape: f32[32,1], index: 8, kind: input, shape index: {}]
  %s9 = inlined_call_operand.vmem [shape: f32[39,32], index: 9, kind: input, shape index: {}]
  %s10 = inlined_call_operand.vmem [shape: f32[39,1], index: 10, kind: input, shape index: {}]
  %s11 = inlined_call_operand.hbm [shape: f32[39,300], index: 11, kind: output, shape index: {}]
  %s12 = sld [smem:[#allocation0]]
  $region115: #{tpu_custom_call.1} parent=0
    _
  %s14 = ssub.s32 1, %s12
  %s15 = scalar_select 0, %s14, %s12
  $region1: #{tpu_custom_call.1} parent=0
    #allocation2 [shape = 'u8[40960]{0}', space=vmem, size = 0xa000, scoped, tag = 'input window, operand 0']
    #allocation3 [shape = 'u8[40960]{0}', space=vmem, size = 0xa000, scoped, tag = 'output window, operand 0']
    #allocation4 [shape = 's32[2]{0}', space=sflag, size = 0x8, scoped, tag = 'scoped memory for tpu_custom_call.1']
    %16 = vsyncpa [#allocation4], 0
    %s17 = scalar_lea.sflag [#allocation4], 1
    %18 = vsyncpa %s17, 0
    loop: start=0, step=1, limit=5
    $region2: #{tpu_custom_call.1} parent=1 // loop_pre_header
      _
    $region3: #{tpu_custom_call.1} parent=1 // loop_header
      %s20 = sphi 0, %s24
      %p21 = scmp.ge.s32.totalorder %s20, 5
      %s30 = sphi 0, %s32
      %s33 = sphi 0, %s30
      %s34 = sphi 0, %s33
      %s50 = sphi 0, %s34
      %s54 = sphi 0, %s54
      %s56 = sphi 0, %s54
      %s57 = sphi 0, %s56
      %s71 = sphi 0, %s57
      %s75 = sphi 0, %s75
      %s77 = sphi 0, %s75
      %s78 = sphi 0, %s77
      %s92 = sphi 0, %s78
      %s96 = sphi 0, %s96
      %s98 = sphi 0, %s96
      %s99 = sphi 0, %s98
      %s113 = sphi 0, %s99
      %s117 = sphi 0, %s117
      %s119 = sphi 0, %s117
      %s120 = sphi 0, %s119
      %s134 = sphi 0, %s120
      %s138 = sphi 0, %s138
      %s140 = sphi 0, %s138
      %s141 = sphi 0, %s140
      %s155 = sphi 0, %s141
      %s159 = sphi 0, %s159
      %s161 = sphi 0, %s159
      %s162 = sphi 0, %s161
      %s176 = sphi 0, %s162
      %s180 = sphi 0, %s180
      %s182 = sphi 0, %s180
      %s183 = sphi 0, %s182
      %s197 = sphi 0, %s183
      %s201 = sphi 0, %s201
      %s203 = sphi 0, %s201
      %s204 = sphi 0, %s203
      %s218 = sphi 0, %s204
      %s222 = sphi 0, %s222
      %s224 = sphi 0, %s222
      %s225 = sphi 0, %s224
      %s239 = sphi 0, %s225
      %s243 = sphi 0, %s243
      %s245 = sphi 0, %s243
      %s246 = sphi 0, %s245
      %s260 = sphi 0, %s246
      %s266 = sphi 0, %s268
      %s269 = sphi 0, %s266
      %s270 = sphi 0, %s269
      %s286 = sphi 0, %s270
    $region4: #{tpu_custom_call.1} parent=1 // loop_header_branch
      %23 = sbr.rel (%p21) target = $region8
    $region5: #{tpu_custom_call.1} parent=1 // loop_body
      %s25 = ssub.s32 %s20, 1
      %s26 = ssub.s32 %s20, 2
      %s27 = sadd.s32 %s20, 1
      %s28 = ssub.s32 %s20, %s27
      %p29 = scmp.eq.s32.totalorder %s28, 0
      %s31 = sadd.s32 %s30, 1
      %s32 = scalar_select %p29, %s30, %s31
      %p35 = pneg %p29
      %p36 = scmp.eq.s32.totalorder %s20, 2
      %p37 = por %p35, %p36
      %p38 = scmp.ne.s32.totalorder %s30, %s33
      %p39 = scmp.eq.s32.totalorder %s20, 0
      %p40 = por %p38, %p39
      %p41 = scmp.ne.s32.totalorder %s30, %s33
      %p42 = scmp.eq.s32.totalorder %s25, 2
      %p43 = por %p41, %p42
      %p44 = scmp.ne.s32.totalorder %s33, %s34
      %p45 = scmp.eq.s32.totalorder %s25, 0
      %p46 = por %p44, %p45
      %p47 = scmp.ne.s32.totalorder %s33, %s34
      %p48 = scmp.eq.s32.totalorder %s26, 2
      %p49 = por %p47, %p48
      %p51 = scmp.ne.s32.totalorder %s34, %s50
      %p52 = scmp.eq.s32.totalorder %s26, 0
      %p53 = por %p51, %p52
      %s55 = sadd.s32 %s54, 1
      %p58 = scmp.eq.s32.totalorder %s20, 2
      %p59 = scmp.ne.s32.totalorder %s54, %s56
      %p60 = scmp.eq.s32.totalorder %s20, 0
      %p61 = por %p59, %p60
      %p62 = scmp.ne.s32.totalorder %s54, %s56
      %p63 = scmp.eq.s32.totalorder %s25, 2
      %p64 = por %p62, %p63
      %p65 = scmp.ne.s32.totalorder %s56, %s57
      %p66 = scmp.eq.s32.totalorder %s25, 0
      %p67 = por %p65, %p66
      %p68 = scmp.ne.s32.totalorder %s56, %s57
      %p69 = scmp.eq.s32.totalorder %s26, 2
      %p70 = por %p68, %p69
      %p72 = scmp.ne.s32.totalorder %s57, %s71
      %p73 = scmp.eq.s32.totalorder %s26, 0
      %p74 = por %p72, %p73
      %s76 = sadd.s32 %s75, 1
      %p79 = scmp.eq.s32.totalorder %s20, 2
      %p80 = scmp.ne.s32.totalorder %s75, %s77
      %p81 = scmp.eq.s32.totalorder %s20, 0
      %p82 = por %p80, %p81
      %p83 = scmp.ne.s32.totalorder %s75, %s77
      %p84 = scmp.eq.s32.totalorder %s25, 2
      %p85 = por %p83, %p84
      %p86 = scmp.ne.s32.totalorder %s77, %s78
      %p87 = scmp.eq.s32.totalorder %s25, 0
      %p88 = por %p86, %p87
      %p89 = scmp.ne.s32.totalorder %s77, %s78
      %p90 = scmp.eq.s32.totalorder %s26, 2
      %p91 = por %p89, %p90
      %p93 = scmp.ne.s32.totalorder %s78, %s92
      %p94 = scmp.eq.s32.totalorder %s26, 0
      %p95 = por %p93, %p94
      %s97 = sadd.s32 %s96, 1
      %p100 = scmp.eq.s32.totalorder %s20, 2
      %p101 = scmp.ne.s32.totalorder %s96, %s98
      %p102 = scmp.eq.s32.totalorder %s20, 0
      %p103 = por %p101, %p102
      %p104 = scmp.ne.s32.totalorder %s96, %s98
      %p105 = scmp.eq.s32.totalorder %s25, 2
      %p106 = por %p104, %p105
      %p107 = scmp.ne.s32.totalorder %s98, %s99
      %p108 = scmp.eq.s32.totalorder %s25, 0
      %p109 = por %p107, %p108
      %p110 = scmp.ne.s32.totalorder %s98, %s99
      %p111 = scmp.eq.s32.totalorder %s26, 2
      %p112 = por %p110, %p111
      %p114 = scmp.ne.s32.totalorder %s99, %s113
      %p115 = scmp.eq.s32.totalorder %s26, 0
      %p116 = por %p114, %p115
      %s118 = sadd.s32 %s117, 1
      %p121 = scmp.eq.s32.totalorder %s20, 2
      %p122 = scmp.ne.s32.totalorder %s117, %s119
      %p123 = scmp.eq.s32.totalorder %s20, 0
      %p124 = por %p122, %p123
      %p125 = scmp.ne.s32.totalorder %s117, %s119
      %p126 = scmp.eq.s32.totalorder %s25, 2
      %p127 = por %p125, %p126
      %p128 = scmp.ne.s32.totalorder %s119, %s120
      %p129 = scmp.eq.s32.totalorder %s25, 0
      %p130 = por %p128, %p129
      %p131 = scmp.ne.s32.totalorder %s119, %s120
      %p132 = scmp.eq.s32.totalorder %s26, 2
      %p133 = por %p131, %p132
      %p135 = scmp.ne.s32.totalorder %s120, %s134
      %p136 = scmp.eq.s32.totalorder %s26, 0
      %p137 = por %p135, %p136
      %s139 = sadd.s32 %s138, 1
      %p142 = scmp.eq.s32.totalorder %s20, 2
      %p143 = scmp.ne.s32.totalorder %s138, %s140
      %p144 = scmp.eq.s32.totalorder %s20, 0
      %p145 = por %p143, %p144
      %p146 = scmp.ne.s32.totalorder %s138, %s140
      %p147 = scmp.eq.s32.totalorder %s25, 2
      %p148 = por %p146, %p147
      %p149 = scmp.ne.s32.totalorder %s140, %s141
      %p150 = scmp.eq.s32.totalorder %s25, 0
      %p151 = por %p149, %p150
      %p152 = scmp.ne.s32.totalorder %s140, %s141
      %p153 = scmp.eq.s32.totalorder %s26, 2
      %p154 = por %p152, %p153
      %p156 = scmp.ne.s32.totalorder %s141, %s155
      %p157 = scmp.eq.s32.totalorder %s26, 0
      %p158 = por %p156, %p157
      %s160 = sadd.s32 %s159, 1
      %p163 = scmp.eq.s32.totalorder %s20, 2
      %p164 = scmp.ne.s32.totalorder %s159, %s161
      %p165 = scmp.eq.s32.totalorder %s20, 0
      %p166 = por %p164, %p165
      %p167 = scmp.ne.s32.totalorder %s159, %s161
      %p168 = scmp.eq.s32.totalorder %s25, 2
      %p169 = por %p167, %p168
      %p170 = scmp.ne.s32.totalorder %s161, %s162
      %p171 = scmp.eq.s32.totalorder %s25, 0
      %p172 = por %p170, %p171
      %p173 = scmp.ne.s32.totalorder %s161, %s162
      %p174 = scmp.eq.s32.totalorder %s26, 2
      %p175 = por %p173, %p174
      %p177 = scmp.ne.s32.totalorder %s162, %s176
      %p178 = scmp.eq.s32.totalorder %s26, 0
      %p179 = por %p177, %p178
      %s181 = sadd.s32 %s180, 1
      %p184 = scmp.eq.s32.totalorder %s20, 2
      %p185 = scmp.ne.s32.totalorder %s180, %s182
      %p186 = scmp.eq.s32.totalorder %s20, 0
      %p187 = por %p185, %p186
      %p188 = scmp.ne.s32.totalorder %s180, %s182
      %p189 = scmp.eq.s32.totalorder %s25, 2
      %p190 = por %p188, %p189
      %p191 = scmp.ne.s32.totalorder %s182, %s183
      %p192 = scmp.eq.s32.totalorder %s25, 0
      %p193 = por %p191, %p192
      %p194 = scmp.ne.s32.totalorder %s182, %s183
      %p195 = scmp.eq.s32.totalorder %s26, 2
      %p196 = por %p194, %p195
      %p198 = scmp.ne.s32.totalorder %s183, %s197
      %p199 = scmp.eq.s32.totalorder %s26, 0
      %p200 = por %p198, %p199
      %s202 = sadd.s32 %s201, 1
      %p205 = scmp.eq.s32.totalorder %s20, 2
      %p206 = scmp.ne.s32.totalorder %s201, %s203
      %p207 = scmp.eq.s32.totalorder %s20, 0
      %p208 = por %p206, %p207
      %p209 = scmp.ne.s32.totalorder %s201, %s203
      %p210 = scmp.eq.s32.totalorder %s25, 2
      %p211 = por %p209, %p210
      %p212 = scmp.ne.s32.totalorder %s203, %s204
      %p213 = scmp.eq.s32.totalorder %s25, 0
      %p214 = por %p212, %p213
      %p215 = scmp.ne.s32.totalorder %s203, %s204
      %p216 = scmp.eq.s32.totalorder %s26, 2
      %p217 = por %p215, %p216
      %p219 = scmp.ne.s32.totalorder %s204, %s218
      %p220 = scmp.eq.s32.totalorder %s26, 0
      %p221 = por %p219, %p220
      %s223 = sadd.s32 %s222, 1
      %p226 = scmp.eq.s32.totalorder %s20, 2
      %p227 = scmp.ne.s32.totalorder %s222, %s224
      %p228 = scmp.eq.s32.totalorder %s20, 0
      %p229 = por %p227, %p228
      %p230 = scmp.ne.s32.totalorder %s222, %s224
      %p231 = scmp.eq.s32.totalorder %s25, 2
      %p232 = por %p230, %p231
      %p233 = scmp.ne.s32.totalorder %s224, %s225
      %p234 = scmp.eq.s32.totalorder %s25, 0
      %p235 = por %p233, %p234
      %p236 = scmp.ne.s32.totalorder %s224, %s225
      %p237 = scmp.eq.s32.totalorder %s26, 2
      %p238 = por %p236, %p237
      %p240 = scmp.ne.s32.totalorder %s225, %s239
      %p241 = scmp.eq.s32.totalorder %s26, 0
      %p242 = por %p240, %p241
      %s244 = sadd.s32 %s243, 1
      %p247 = scmp.eq.s32.totalorder %s20, 2
      %p248 = scmp.ne.s32.totalorder %s243, %s245
      %p249 = scmp.eq.s32.totalorder %s20, 0
      %p250 = por %p248, %p249
      %p251 = scmp.ne.s32.totalorder %s243, %s245
      %p252 = scmp.eq.s32.totalorder %s25, 2
      %p253 = por %p251, %p252
      %p254 = scmp.ne.s32.totalorder %s245, %s246
      %p255 = scmp.eq.s32.totalorder %s25, 0
      %p256 = por %p254, %p255
      %p257 = scmp.ne.s32.totalorder %s245, %s246
      %p258 = scmp.eq.s32.totalorder %s26, 2
      %p259 = por %p257, %p258
      %p261 = scmp.ne.s32.totalorder %s246, %s260
      %p262 = scmp.eq.s32.totalorder %s26, 0
      %p263 = por %p261, %p262
      %s264 = ssub.s32 %s20, %s27
      %p265 = scmp.eq.s32.totalorder %s264, 0
      %s267 = sadd.s32 %s266, 1
      %s268 = scalar_select %p265, %s266, %s267
      %p271 = pneg %p265
      %p272 = scmp.eq.s32.totalorder %s20, 2
      %p273 = por %p271, %p272
      %p274 = scmp.ne.s32.totalorder %s266, %s269
      %p275 = scmp.eq.s32.totalorder %s20, 0
      %p276 = por %p274, %p275
      %p277 = scmp.ne.s32.totalorder %s266, %s269
      %p278 = scmp.eq.s32.totalorder %s25, 2
      %p279 = por %p277, %p278
      %p280 = scmp.ne.s32.totalorder %s269, %s270
      %p281 = scmp.eq.s32.totalorder %s25, 0
      %p282 = por %p280, %p281
      %p283 = scmp.ne.s32.totalorder %s269, %s270
      %p284 = scmp.eq.s32.totalorder %s26, 2
      %p285 = por %p283, %p284
      %p287 = scmp.ne.s32.totalorder %s270, %s286
      %p288 = scmp.eq.s32.totalorder %s26, 0
      %p289 = por %p287, %p288
      %p290 = scmp.le.s32.totalorder 1, %s20
      %p291 = scmp.lt.s32.totalorder %s20, 4
      %p292 = pnand %p290, %p291
      %p293 = pneg %p292
      // Predicated region
      $region9: #{tpu_custom_call.1} parent=5 // pred_check
        _
      $region10: #{tpu_custom_call.1} parent=5 // pred_check_branch
        %295 = sbr.rel (%p292) target = $region12
      $region11: #{tpu_custom_call.1} parent=5 // pred_region
        %s296 = ssub.s32 %s20, 1
        // Predicated region
        $region13: #{tpu_custom_call.1} parent=11 // pred_check
          %p297 = pneg %p67
        $region14: #{tpu_custom_call.1} parent=11 // pred_check_branch
          %299 = sbr.rel (%p297) target = $region16
        $region15: #{tpu_custom_call.1} parent=11 // pred_region
          _
        $region16: #{tpu_custom_call.1} parent=11 // pred_fallthru
          _
        // Predicated region
        $region17: #{tpu_custom_call.1} parent=11 // pred_check
          %p300 = pneg %p88
        $region18: #{tpu_custom_call.1} parent=11 // pred_check_branch
          %302 = sbr.rel (%p300) target = $region20
        $region19: #{tpu_custom_call.1} parent=11 // pred_region
          _
        $region20: #{tpu_custom_call.1} parent=11 // pred_fallthru
          _
        // Predicated region
        $region21: #{tpu_custom_call.1} parent=11 // pred_check
          %p303 = pneg %p109
        $region22: #{tpu_custom_call.1} parent=11 // pred_check_branch
          %305 = sbr.rel (%p303) target = $region24
        $region23: #{tpu_custom_call.1} parent=11 // pred_region
          _
        $region24: #{tpu_custom_call.1} parent=11 // pred_fallthru
          _
        // Predicated region
        $region25: #{tpu_custom_call.1} parent=11 // pred_check
          %p306 = pneg %p130
        $region26: #{tpu_custom_call.1} parent=11 // pred_check_branch
          %308 = sbr.rel (%p306) target = $region28
        $region27: #{tpu_custom_call.1} parent=11 // pred_region
          _
        $region28: #{tpu_custom_call.1} parent=11 // pred_fallthru
          _
        // Predicated region
        $region29: #{tpu_custom_call.1} parent=11 // pred_check
          %p309 = pneg %p151
        $region30: #{tpu_custom_call.1} parent=11 // pred_check_branch
          %311 = sbr.rel (%p309) target = $region32
        $region31: #{tpu_custom_call.1} parent=11 // pred_region
          _
        $region32: #{tpu_custom_call.1} parent=11 // pred_fallthru
          _
        // Predicated region
        $region33: #{tpu_custom_call.1} parent=11 // pred_check
          %p312 = pneg %p172
        $region34: #{tpu_custom_call.1} parent=11 // pred_check_branch
          %314 = sbr.rel (%p312) target = $region36
        $region35: #{tpu_custom_call.1} parent=11 // pred_region
          _
        $region36: #{tpu_custom_call.1} parent=11 // pred_fallthru
          _
        // Predicated region
        $region37: #{tpu_custom_call.1} parent=11 // pred_check
          %p315 = pneg %p193
        $region38: #{tpu_custom_call.1} parent=11 // pred_check_branch
          %317 = sbr.rel (%p315) target = $region40
        $region39: #{tpu_custom_call.1} parent=11 // pred_region
          _
        $region40: #{tpu_custom_call.1} parent=11 // pred_fallthru
          _
        // Predicated region
        $region41: #{tpu_custom_call.1} parent=11 // pred_check
          %p318 = pneg %p214
        $region42: #{tpu_custom_call.1} parent=11 // pred_check_branch
          %320 = sbr.rel (%p318) target = $region44
        $region43: #{tpu_custom_call.1} parent=11 // pred_region
          _
        $region44: #{tpu_custom_call.1} parent=11 // pred_fallthru
          _
        // Predicated region
        $region45: #{tpu_custom_call.1} parent=11 // pred_check
          %p321 = pneg %p235
        $region46: #{tpu_custom_call.1} parent=11 // pred_check_branch
          %323 = sbr.rel (%p321) target = $region48
        $region47: #{tpu_custom_call.1} parent=11 // pred_region
          _
        $region48: #{tpu_custom_call.1} parent=11 // pred_fallthru
          _
        // Predicated region
        $region49: #{tpu_custom_call.1} parent=11 // pred_check
          %p324 = pneg %p256
        $region50: #{tpu_custom_call.1} parent=11 // pred_check_branch
          %326 = sbr.rel (%p324) target = $region52
        $region51: #{tpu_custom_call.1} parent=11 // pred_region
          _
        $region52: #{tpu_custom_call.1} parent=11 // pred_fallthru
          _
      $region12: #{tpu_custom_call.1} parent=5 // pred_fallthru
        _
      %p327 = scmp.lt.s32.totalorder %s20, 3
      // Predicated region
      $region53: #{tpu_custom_call.1} parent=5 // pred_check
        %p328 = pneg %p327
      $region54: #{tpu_custom_call.1} parent=5 // pred_check_branch
        %330 = sbr.rel (%p328) target = $region56
      $region55: #{tpu_custom_call.1} parent=5 // pred_region
        // Predicated region
        $region57: #{tpu_custom_call.1} parent=55 // pred_check
          %p331 = pneg %p40
        $region58: #{tpu_custom_call.1} parent=55 // pred_check_branch
          %333 = sbr.rel (%p331) target = $region60
        $region59: #{tpu_custom_call.1} parent=55 // pred_region
          %s334 = sand.u32 %s30, 1
          %s335 = sand.u32 %s30, 1
          %s336 = smul.addr %s335, 40
          %s337 = scalar_lea.vmem [#allocation2], %s336
          %s338 = smul.addr %s20, 8
          %s339 = scalar_lea.vmem %s0, %s338
          // Predicated region
          $region61: #{tpu_custom_call.1} parent=59 // pred_check
            _
          $region62: #{tpu_custom_call.1} parent=59 // pred_check_branch
            %341 = sbr.rel (0) target = $region64
          $region63: #{tpu_custom_call.1} parent=59 // pred_region
            // Predicated region
            $region65: #{tpu_custom_call.1} parent=63 // pred_check
              _
            $region66: #{tpu_custom_call.1} parent=63 // pred_check_branch
              %343 = sbr.rel (0) target = $region68
            $region67: #{tpu_custom_call.1} parent=63 // pred_region
              // Predicated region
              $region80: #{tpu_custom_call.1} parent=67 // pred_check
                _
              $region81: #{tpu_custom_call.1} parent=67 // pred_check_branch
                %367 = sbr.rel (0) target = $region83
              $region82: #{tpu_custom_call.1} parent=67 // pred_region
                loop: start=0, step=1, limit=1
                $region84: #{tpu_custom_call.1} parent=82 // loop_pre_header
                  _
                $region85: #{tpu_custom_call.1} parent=82 // loop_header
                  %s369 = sphi 0, %s373
                  %p370 = scmp.ge.s32.totalorder %s369, 1
                  %s374 = sphi %s339, %s339
                  %s375 = sphi %s337, %s337
                $region86: #{tpu_custom_call.1} parent=82 // loop_header_branch
                  %372 = sbr.rel (%p370) target = $region90
                $region87: #{tpu_custom_call.1} parent=82 // loop_body
                  %v376 = vld [vmem:[%s374] sm:$0xff]
                  %377 = vst [vmem:[%s375] sm:$0xff] %v376
                  %v378 = vld [vmem:[%s374 + $0x18] sm:$0xff]
                  %379 = vst [vmem:[%s375 + $0x8] sm:$0xff] %v378
                  %v380 = vld [vmem:[%s374 + $0x30] sm:$0xff]
                  %381 = vst [vmem:[%s375 + $0x10] sm:$0xff] %v380
                  %v382 = vld [vmem:[%s374 + $0x48] sm:$0xff]
                  %383 = vst [vmem:[%s375 + $0x18] sm:$0xff] %v382
                  %v384 = vld [vmem:[%s374 + $0x60] sm:$0xff]
                  %385 = vst [vmem:[%s375 + $0x20] sm:$0xff] %v384
                $region88: #{tpu_custom_call.1} parent=82 // loop_footer
                  %s373 = sadd.s32 1, %s369
                $region89: #{tpu_custom_call.1} parent=82 // loop_footer_branch
                  %368 = sbr.rel target = $region85
                $region90: #{tpu_custom_call.1} parent=82 // loop_exit
                  _
              $region83: #{tpu_custom_call.1} parent=67 // pred_fallthru
                _
              // Predicated region
              $region91: #{tpu_custom_call.1} parent=67 // pred_check
                _
              $region92: #{tpu_custom_call.1} parent=67 // pred_check_branch
                %387 = sbr.rel target = $region94
              $region93: #{tpu_custom_call.1} parent=67 // pred_region
                _
              $region94: #{tpu_custom_call.1} parent=67 // pred_fallthru
                _
            $region68: #{tpu_custom_call.1} parent=63 // pred_fallthru
              _
            // Predicated region
            $region69: #{tpu_custom_call.1} parent=63 // pred_check
              _
            $region70: #{tpu_custom_call.1} parent=63 // pred_check_branch
              %345 = sbr.rel target = $region72
            $region71: #{tpu_custom_call.1} parent=63 // pred_region
              %s347 = ssub.s32 256, 1
              loop: start=0, step=1, limit=1
              $region73: #{tpu_custom_call.1} parent=71 // loop_pre_header
                _
              $region74: #{tpu_custom_call.1} parent=71 // loop_header
                %s349 = sphi 0, %s353
                %p350 = scmp.ge.s32.totalorder %s349, 1
                %s354 = sphi %s339, %s339
                %s355 = sphi %s337, %s337
              $region75: #{tpu_custom_call.1} parent=71 // loop_header_branch
                %352 = sbr.rel (%p350) target = $region79
              $region76: #{tpu_custom_call.1} parent=71 // loop_body
                %v356 = vld [vmem:[%s354] sm:%s347]
                %357 = vst [vmem:[%s355] sm:%s347] %v356
                %v358 = vld [vmem:[%s354 + $0x18] sm:%s347]
                %359 = vst [vmem:[%s355 + $0x8] sm:%s347] %v358
                %v360 = vld [vmem:[%s354 + $0x30] sm:%s347]
                %361 = vst [vmem:[%s355 + $0x10] sm:%s347] %v360
                %v362 = vld [vmem:[%s354 + $0x48] sm:%s347]
                %363 = vst [vmem:[%s355 + $0x18] sm:%s347] %v362
                %v364 = vld [vmem:[%s354 + $0x60] sm:%s347]
                %365 = vst [vmem:[%s355 + $0x20] sm:%s347] %v364
              $region77: #{tpu_custom_call.1} parent=71 // loop_footer
                %s353 = sadd.s32 1, %s349
              $region78: #{tpu_custom_call.1} parent=71 // loop_footer_branch
                %348 = sbr.rel target = $region74
              $region79: #{tpu_custom_call.1} parent=71 // loop_exit
                _
            $region72: #{tpu_custom_call.1} parent=63 // pred_fallthru
              _
          $region64: #{tpu_custom_call.1} parent=59 // pred_fallthru
            _
          %388 = vnop
        $region60: #{tpu_custom_call.1} parent=55 // pred_fallthru
          _
      $region56: #{tpu_custom_call.1} parent=5 // pred_fallthru
        _
      %p389 = scmp.le.s32.totalorder 1, %s20
      %p390 = scmp.lt.s32.totalorder %s20, 4
      %p391 = pnand %p389, %p390
      %p392 = pneg %p391
      // Predicated region
      $region95: #{tpu_custom_call.1} parent=5 // pred_check
        _
      $region96: #{tpu_custom_call.1} parent=5 // pred_check_branch
        %394 = sbr.rel (%p391) target = $region98
      $region97: #{tpu_custom_call.1} parent=5 // pred_region
        %s395 = ssub.s32 %s20, 1
        %s396 = sand.u32 %s33, 1
        %s397 = sand.u32 %s33, 1
        %s398 = smul.addr %s397, 40
        %s399 = scalar_lea.vmem [#allocation2], %s398
        // Predicated region
        $region99: #{tpu_custom_call.1} parent=97 // pred_check
          %p400 = pneg %p46
        $region100: #{tpu_custom_call.1} parent=97 // pred_check_branch
          %402 = sbr.rel (%p400) target = $region102
        $region101: #{tpu_custom_call.1} parent=97 // pred_region
          _
        $region102: #{tpu_custom_call.1} parent=97 // pred_fallthru
          _
        %s403 = sand.u32 %s33, 1
        %s404 = sand.u32 %s33, 1
        %s405 = smul.addr %s404, 40
        %s406 = scalar_lea.vmem [#allocation2], %s405
        %p407 = pneg %p46
        %p408 = pneg %p43
        %p409 = pneg %p67
        %p410 = pneg %p64
        %p411 = pneg %p88
        %p412 = pneg %p85
        %p413 = pneg %p109
        %p414 = pneg %p106
        %p415 = pneg %p130
        %p416 = pneg %p127
        %p417 = pneg %p151
        %p418 = pneg %p148
        %p419 = pneg %p172
        %p420 = pneg %p169
        %p421 = pneg %p193
        %p422 = pneg %p190
        %p423 = pneg %p214
        %p424 = pneg %p211
        %p425 = pneg %p235
        %p426 = pneg %p232
        %p427 = pneg %p256
        %p428 = pneg %p253
        %p429 = pneg %p282
        %p430 = pneg %p279
        %s431 = sand.u32 %s269, 1
        %s432 = scalar_lea.sflag [#allocation4], %s431
        %s433 = sand.u32 %s269, 1
        %s434 = smul.addr %s433, 40
        %s435 = scalar_lea.vmem [#allocation3], %s434
        %v436 = vld [vmem:[%s399] sm:$0xff]
        %v437 = vld [vmem:[%s399 + $0x8] sm:$0xff]
        %v438 = vld [vmem:[%s399 + $0x10] sm:$0xff]
        %v439 = vld [vmem:[%s399 + $0x18] sm:$0xff]
        %v440 = vld [vmem:[%s399 + $0x20] sm:$0x7f]
        %v441 = vld [vmem:[%s1] sm:$0xff]
        %v442 = vld [vmem:[%s1 + $0x8] sm:$0xff]
        %v443 = vld [vmem:[%s1 + $0x10] sm:$0xff]
        %v444 = vld [vmem:[%s1 + $0x18] sm:$0xff]
        %v445 = vld [vmem:[%s2] sm:$0xff]
        %v446 = vld [vmem:[%s2 + $0x8] sm:$0xff]
        %v447 = vld [vmem:[%s2 + $0x10] sm:$0xff]
        %v448 = vld [vmem:[%s2 + $0x18] sm:$0xff]
        %450 = vset.pattern.permute.xlu0 0
        %451 = vperm.xlu0 %450, %v445
        %v452 = vpop.permute.xlu0 %451
        %455 = vset.pattern.permute.xlu0 0
        %456 = vperm.xlu0 %455, %v446
        %v457 = vpop.permute.xlu0 %456
        %460 = vset.pattern.permute.xlu0 0
        %461 = vperm.xlu0 %460, %v447
        %v462 = vpop.permute.xlu0 %461
        %465 = vset.pattern.permute.xlu0 0
        %466 = vperm.xlu0 %465, %v448
        %v467 = vpop.permute.xlu0 %466
        %vm469 = vcmask 318464
        %v471 = vsel %vm469, %v441, 0
        %v474 = vsel %vm469, %v442, 0
        %v477 = vsel %vm469, %v443, 0
        %v480 = vsel %vm469, %v444, 0
        %vm482 = vcmask 1046528
        %v484 = vsel %vm482, %v440, 0
        %486 = vmatprep.subr.mxu0 0.0
        %487 = vmatpush1.msra.mxu0 0.0
        %488 = vmatprep.subr.mxu0 0.0
        %489 = vmatpush1.msra.mxu0 0.0
        %490 = vmatprep.subr.mxu0 0.0
        %491 = vmatpush1.msra.mxu0 0.0
        %492 = vmatprep.subr.mxu0 0.0
        %493 = vmatpush1.msra.mxu0 0.0
        %494 = vmatprep.subr.mxu0 0.0
        %495 = vmatpush1.msra.mxu0 0.0
        %496 = vmatprep.subr.mxu0 0.0
        %497 = vmatpush1.msra.mxu0 0.0
        %498 = vmatprep.subr.mxu0 0.0
        %499 = vmatpush1.msra.mxu0 0.0
        %500 = vmatprep.subr.mxu0 0.0
        %501 = vmatpush1.msra.mxu0 0.0
        %502 = vmatprep.subr.mxu0 0.0
        %503 = vmatpush1.msra.mxu0 0.0
        %504 = vmatprep.subr.mxu0 0.0
        %505 = vmatpush1.msra.mxu0 0.0
        %506 = vmatprep.subr.mxu0 0.0
        %507 = vmatpush1.msra.mxu0 0.0
        %508 = vmatprep.subr.mxu0 0.0
        %509 = vmatpush1.msra.mxu0 %v484
        %510 = vmatprep.subr.mxu0 0.0
        %511 = vmatpush1.msra.mxu0 %v439
        %512 = vmatprep.subr.mxu0 0.0
        %513 = vmatpush1.msra.mxu0 %v438
        %514 = vmatprep.subr.mxu0 0.0
        %515 = vmatpush1.msra.mxu0 %v437
        %516 = vmatprep.subr.mxu0 0.0
        %517 = vmatpush1.msra.mxu0 %v436
        %518 = vmatprep.subr.mxu0 0.0
        %519 = vmatpush2.msra.mxu0 0.0
        %520 = vmatprep.subr.mxu0 0.0
        %521 = vmatpush2.msra.mxu0 0.0
        %522 = vmatprep.subr.mxu0 0.0
        %523 = vmatpush2.msra.mxu0 0.0
        %524 = vmatprep.subr.mxu0 0.0
        %525 = vmatpush2.msra.mxu0 0.0
        %526 = vmatprep.subr.mxu0 0.0
        %527 = vmatpush2.msra.mxu0 0.0
        %528 = vmatprep.subr.mxu0 0.0
        %529 = vmatpush2.msra.mxu0 0.0
        %530 = vmatprep.subr.mxu0 0.0
        %531 = vmatpush2.msra.mxu0 0.0
        %532 = vmatprep.subr.mxu0 0.0
        %533 = vmatpush2.msra.mxu0 0.0
        %534 = vmatprep.subr.mxu0 0.0
        %535 = vmatpush2.msra.mxu0 0.0
        %536 = vmatprep.subr.mxu0 0.0
        %537 = vmatpush2.msra.mxu0 0.0
        %538 = vmatprep.subr.mxu0 0.0
        %539 = vmatpush2.msra.mxu0 0.0
        %540 = vmatprep.subr.mxu0 0.0
        %541 = vmatpush2.msra.mxu0 0.0
        %542 = vmatprep.subr.mxu0 0.0
        %543 = vmatpush2.msra.mxu0 0.0
        %544 = vmatprep.subr.mxu0 0.0
        %545 = vmatpush2.msra.mxu0 0.0
        %546 = vmatprep.subr.mxu0 0.0
        %547 = vmatpush2.msra.mxu0 0.0
        %548 = vmatprep.subr.mxu0 0.0
        %549 = vmatpush2.msra.mxu0 0.0
        %550 = vmatprep.mubr.f32.mxu0 0.0
        %551 = vmatmul.mubr.f32.gmra.mxu0 %v471
        %v552 = vpop.f32.mrf.mxu0
        %v553 = vadd.f32 %v452, %v552
        %v554 = vpop.f32.mrf.mxu0
        %555 = vmatprep.mubr.f32.mxu0 0.0
        %556 = vmatmul.mubr.f32.gmra.mxu0 %v474
        %v557 = vpop.f32.mrf.mxu0
        %v558 = vadd.f32 %v457, %v557
        %v559 = vpop.f32.mrf.mxu0
        %560 = vmatprep.mubr.f32.mxu0 0.0
        %561 = vmatmul.mubr.f32.gmra.mxu0 %v477
        %v562 = vpop.f32.mrf.mxu0
        %v563 = vadd.f32 %v462, %v562
        %v564 = vpop.f32.mrf.mxu0
        %565 = vmatprep.mubr.f32.mxu0 0.0
        %566 = vmatmul.mubr.f32.gmra.mxu0 %v480
        %v567 = vpop.f32.mrf.mxu0
        %v568 = vadd.f32 %v467, %v567
        %v569 = vpop.f32.mrf.mxu0
        %570 = vdwg.mxu0
        %v571 = vmax.f32 %v553, 0.0
        %v572 = vmax.f32 %v558, 0.0
        %v573 = vmax.f32 %v563, 0.0
        %v574 = vmax.f32 %v568, 0.0
        %v575 = vld [vmem:[%s3] sm:$0xff]
        %v576 = vld [vmem:[%s3 + $0x8] sm:$0xff]
        %v577 = vld [vmem:[%s3 + $0x10] sm:$0xf]
        %v578 = vld [vmem:[%s4] sm:$0xff]
        %v579 = vld [vmem:[%s4 + $0x8] sm:$0xff]
        %v580 = vld [vmem:[%s4 + $0x10] sm:$0xf]
        %582 = vset.pattern.permute.xlu0 0
        %583 = vperm.xlu0 %582, %v578
        %v584 = vpop.permute.xlu0 %583
        %587 = vset.pattern.permute.xlu0 0
        %588 = vperm.xlu0 %587, %v579
        %v589 = vpop.permute.xlu0 %588
        %592 = vset.pattern.permute.xlu0 0
        %593 = vperm.xlu0 %592, %v580
        %v594 = vpop.permute.xlu0 %593
        %vm596 = vcmask 261120
        %v598 = vsel %vm596, %v575, 0
        %v601 = vsel %vm596, %v576, 0
        %v604 = vsel %vm596, %v577, 0
        %606 = vmatprep.subr.mxu0 0.0
        %607 = vmatpush1.msra.mxu0 0.0
        %608 = vmatprep.subr.mxu0 0.0
        %609 = vmatpush1.msra.mxu0 0.0
        %610 = vmatprep.subr.mxu0 0.0
        %611 = vmatpush1.msra.mxu0 0.0
        %612 = vmatprep.subr.mxu0 0.0
        %613 = vmatpush1.msra.mxu0 0.0
        %614 = vmatprep.subr.mxu0 0.0
        %615 = vmatpush1.msra.mxu0 0.0
        %616 = vmatprep.subr.mxu0 0.0
        %617 = vmatpush1.msra.mxu0 0.0
        %618 = vmatprep.subr.mxu0 0.0
        %619 = vmatpush1.msra.mxu0 0.0
        %620 = vmatprep.subr.mxu0 0.0
        %621 = vmatpush1.msra.mxu0 0.0
        %622 = vmatprep.subr.mxu0 0.0
        %623 = vmatpush1.msra.mxu0 0.0
        %624 = vmatprep.subr.mxu0 0.0
        %625 = vmatpush1.msra.mxu0 0.0
        %626 = vmatprep.subr.mxu0 0.0
        %627 = vmatpush1.msra.mxu0 0.0
        %628 = vmatprep.subr.mxu0 0.0
        %629 = vmatpush1.msra.mxu0 0.0
        %630 = vmatprep.subr.mxu0 0.0
        %631 = vmatpush1.msra.mxu0 %v574
        %632 = vmatprep.subr.mxu0 0.0
        %633 = vmatpush1.msra.mxu0 %v573
        %634 = vmatprep.subr.mxu0 0.0
        %635 = vmatpush1.msra.mxu0 %v572
        %636 = vmatprep.subr.mxu0 0.0
        %637 = vmatpush1.msra.mxu0 %v571
        %638 = vmatprep.subr.mxu0 0.0
        %639 = vmatpush2.msra.mxu0 0.0
        %640 = vmatprep.subr.mxu0 0.0
        %641 = vmatpush2.msra.mxu0 0.0
        %642 = vmatprep.subr.mxu0 0.0
        %643 = vmatpush2.msra.mxu0 0.0
        %644 = vmatprep.subr.mxu0 0.0
        %645 = vmatpush2.msra.mxu0 0.0
        %646 = vmatprep.subr.mxu0 0.0
        %647 = vmatpush2.msra.mxu0 0.0
        %648 = vmatprep.subr.mxu0 0.0
        %649 = vmatpush2.msra.mxu0 0.0
        %650 = vmatprep.subr.mxu0 0.0
        %651 = vmatpush2.msra.mxu0 0.0
        %652 = vmatprep.subr.mxu0 0.0
        %653 = vmatpush2.msra.mxu0 0.0
        %654 = vmatprep.subr.mxu0 0.0
        %655 = vmatpush2.msra.mxu0 0.0
        %656 = vmatprep.subr.mxu0 0.0
        %657 = vmatpush2.msra.mxu0 0.0
        %658 = vmatprep.subr.mxu0 0.0
        %659 = vmatpush2.msra.mxu0 0.0
        %660 = vmatprep.subr.mxu0 0.0
        %661 = vmatpush2.msra.mxu0 0.0
        %662 = vmatprep.subr.mxu0 0.0
        %663 = vmatpush2.msra.mxu0 0.0
        %664 = vmatprep.subr.mxu0 0.0
        %665 = vmatpush2.msra.mxu0 0.0
        %666 = vmatprep.subr.mxu0 0.0
        %667 = vmatpush2.msra.mxu0 0.0
        %668 = vmatprep.subr.mxu0 0.0
        %669 = vmatpush2.msra.mxu0 0.0
        %670 = vmatprep.mubr.f32.mxu0 0.0
        %671 = vmatmul.mubr.f32.gmra.mxu0 %v598
        %v672 = vpop.f32.mrf.mxu0
        %v673 = vadd.f32 %v584, %v672
        %v674 = vpop.f32.mrf.mxu0
        %675 = vmatprep.mubr.f32.mxu0 0.0
        %676 = vmatmul.mubr.f32.gmra.mxu0 %v601
        %v677 = vpop.f32.mrf.mxu0
        %v678 = vadd.f32 %v589, %v677
        %v679 = vpop.f32.mrf.mxu0
        %680 = vmatprep.mubr.f32.mxu0 0.0
        %681 = vmatmul.mubr.f32.gmra.mxu0 %v604
        %v682 = vpop.f32.mrf.mxu0
        %v683 = vadd.f32 %v594, %v682
        %v684 = vpop.f32.mrf.mxu0
        %685 = vdwg.mxu0
        %v686 = vmax.f32 %v673, 0.0
        %v687 = vmax.f32 %v678, 0.0
        %v688 = vmax.f32 %v683, 0.0
        %v689 = vld [vmem:[%s5] sm:$0xff]
        %v690 = vld [vmem:[%s5 + $0x8] sm:$0xff]
        %v691 = vld [vmem:[%s5 + $0x10] sm:$0xf]
        %v692 = vld [vmem:[%s6] sm:$0xff]
        %v693 = vld [vmem:[%s6 + $0x8] sm:$0xff]
        %v694 = vld [vmem:[%s6 + $0x10] sm:$0xf]
        %696 = vset.pattern.permute.xlu0 0
        %697 = vperm.xlu0 %696, %v692
        %v698 = vpop.permute.xlu0 %697
        %701 = vset.pattern.permute.xlu0 0
        %702 = vperm.xlu0 %701, %v693
        %v703 = vpop.permute.xlu0 %702
        %706 = vset.pattern.permute.xlu0 0
        %707 = vperm.xlu0 %706, %v694
        %v708 = vpop.permute.xlu0 %707
        %vm710 = vcmask 162816
        %v712 = vsel %vm710, %v689, 0
        %v715 = vsel %vm710, %v690, 0
        %v718 = vsel %vm710, %v691, 0
        %vm720 = vcmask 1043456
        %v722 = vsel %vm720, %v688, 0
        %724 = vmatprep.subr.mxu0 0.0
        %725 = vmatpush1.msra.mxu0 0.0
        %726 = vmatprep.subr.mxu0 0.0
        %727 = vmatpush1.msra.mxu0 0.0
        %728 = vmatprep.subr.mxu0 0.0
        %729 = vmatpush1.msra.mxu0 0.0
        %730 = vmatprep.subr.mxu0 0.0
        %731 = vmatpush1.msra.mxu0 0.0
        %732 = vmatprep.subr.mxu0 0.0
        %733 = vmatpush1.msra.mxu0 0.0
        %734 = vmatprep.subr.mxu0 0.0
        %735 = vmatpush1.msra.mxu0 0.0
        %736 = vmatprep.subr.mxu0 0.0
        %737 = vmatpush1.msra.mxu0 0.0
        %738 = vmatprep.subr.mxu0 0.0
        %739 = vmatpush1.msra.mxu0 0.0
        %740 = vmatprep.subr.mxu0 0.0
        %741 = vmatpush1.msra.mxu0 0.0
        %742 = vmatprep.subr.mxu0 0.0
        %743 = vmatpush1.msra.mxu0 0.0
        %744 = vmatprep.subr.mxu0 0.0
        %745 = vmatpush1.msra.mxu0 0.0
        %746 = vmatprep.subr.mxu0 0.0
        %747 = vmatpush1.msra.mxu0 0.0
        %748 = vmatprep.subr.mxu0 0.0
        %749 = vmatpush1.msra.mxu0 0.0
        %750 = vmatprep.subr.mxu0 0.0
        %751 = vmatpush1.msra.mxu0 %v722
        %752 = vmatprep.subr.mxu0 0.0
        %753 = vmatpush1.msra.mxu0 %v687
        %754 = vmatprep.subr.mxu0 0.0
        %755 = vmatpush1.msra.mxu0 %v686
        %756 = vmatprep.subr.mxu0 0.0
        %757 = vmatpush2.msra.mxu0 0.0
        %758 = vmatprep.subr.mxu0 0.0
        %759 = vmatpush2.msra.mxu0 0.0
        %760 = vmatprep.subr.mxu0 0.0
        %761 = vmatpush2.msra.mxu0 0.0
        %762 = vmatprep.subr.mxu0 0.0
        %763 = vmatpush2.msra.mxu0 0.0
        %764 = vmatprep.subr.mxu0 0.0
        %765 = vmatpush2.msra.mxu0 0.0
        %766 = vmatprep.subr.mxu0 0.0
        %767 = vmatpush2.msra.mxu0 0.0
        %768 = vmatprep.subr.mxu0 0.0
        %769 = vmatpush2.msra.mxu0 0.0
        %770 = vmatprep.subr.mxu0 0.0
        %771 = vmatpush2.msra.mxu0 0.0
        %772 = vmatprep.subr.mxu0 0.0
        %773 = vmatpush2.msra.mxu0 0.0
        %774 = vmatprep.subr.mxu0 0.0
        %775 = vmatpush2.msra.mxu0 0.0
        %776 = vmatprep.subr.mxu0 0.0
        %777 = vmatpush2.msra.mxu0 0.0
        %778 = vmatprep.subr.mxu0 0.0
        %779 = vmatpush2.msra.mxu0 0.0
        %780 = vmatprep.subr.mxu0 0.0
        %781 = vmatpush2.msra.mxu0 0.0
        %782 = vmatprep.subr.mxu0 0.0
        %783 = vmatpush2.msra.mxu0 0.0
        %784 = vmatprep.subr.mxu0 0.0
        %785 = vmatpush2.msra.mxu0 0.0
        %786 = vmatprep.subr.mxu0 0.0
        %787 = vmatpush2.msra.mxu0 0.0
        %788 = vmatprep.mubr.f32.mxu0 0.0
        %789 = vmatmul.mubr.f32.gmra.mxu0 %v712
        %v790 = vpop.f32.mrf.mxu0
        %v791 = vadd.f32 %v698, %v790
        %v792 = vpop.f32.mrf.mxu0
        %793 = vmatprep.mubr.f32.mxu0 0.0
        %794 = vmatmul.mubr.f32.gmra.mxu0 %v715
        %v795 = vpop.f32.mrf.mxu0
        %v796 = vadd.f32 %v703, %v795
        %v797 = vpop.f32.mrf.mxu0
        %798 = vmatprep.mubr.f32.mxu0 0.0
        %799 = vmatmul.mubr.f32.gmra.mxu0 %v718
        %v800 = vpop.f32.mrf.mxu0
        %v801 = vadd.f32 %v708, %v800
        %v802 = vpop.f32.mrf.mxu0
        %803 = vdwg.mxu0
        %v804 = vmax.f32 %v791, 0.0
        %v805 = vmax.f32 %v796, 0.0
        %v806 = vmax.f32 %v801, 0.0
        %v807 = vld [vmem:[%s7] sm:$0xff]
        %v808 = vld [vmem:[%s7 + $0x8] sm:$0xff]
        %v809 = vld [vmem:[%s7 + $0x10] sm:$0xff]
        %v810 = vld [vmem:[%s7 + $0x18] sm:$0xff]
        %v811 = vld [vmem:[%s8] sm:$0xff]
        %v812 = vld [vmem:[%s8 + $0x8] sm:$0xff]
        %v813 = vld [vmem:[%s8 + $0x10] sm:$0xff]
        %v814 = vld [vmem:[%s8 + $0x18] sm:$0xff]
        %816 = vset.pattern.permute.xlu0 0
        %817 = vperm.xlu0 %816, %v811
        %v818 = vpop.permute.xlu0 %817
        %821 = vset.pattern.permute.xlu0 0
        %822 = vperm.xlu0 %821, %v812
        %v823 = vpop.permute.xlu0 %822
        %826 = vset.pattern.permute.xlu0 0
        %827 = vperm.xlu0 %826, %v813
        %v828 = vpop.permute.xlu0 %827
        %831 = vset.pattern.permute.xlu0 0
        %832 = vperm.xlu0 %831, %v814
        %v833 = vpop.permute.xlu0 %832
        %v836 = vsel %vm710, %v807, 0
        %v839 = vsel %vm710, %v808, 0
        %v842 = vsel %vm710, %v809, 0
        %v845 = vsel %vm710, %v810, 0
        %v848 = vsel %vm720, %v806, 0
        %850 = vmatprep.subr.mxu0 0.0
        %851 = vmatpush1.msra.mxu0 0.0
        %852 = vmatprep.subr.mxu0 0.0
        %853 = vmatpush1.msra.mxu0 0.0
        %854 = vmatprep.subr.mxu0 0.0
        %855 = vmatpush1.msra.mxu0 0.0
        %856 = vmatprep.subr.mxu0 0.0
        %857 = vmatpush1.msra.mxu0 0.0
        %858 = vmatprep.subr.mxu0 0.0
        %859 = vmatpush1.msra.mxu0 0.0
        %860 = vmatprep.subr.mxu0 0.0
        %861 = vmatpush1.msra.mxu0 0.0
        %862 = vmatprep.subr.mxu0 0.0
        %863 = vmatpush1.msra.mxu0 0.0
        %864 = vmatprep.subr.mxu0 0.0
        %865 = vmatpush1.msra.mxu0 0.0
        %866 = vmatprep.subr.mxu0 0.0
        %867 = vmatpush1.msra.mxu0 0.0
        %868 = vmatprep.subr.mxu0 0.0
        %869 = vmatpush1.msra.mxu0 0.0
        %870 = vmatprep.subr.mxu0 0.0
        %871 = vmatpush1.msra.mxu0 0.0
        %872 = vmatprep.subr.mxu0 0.0
        %873 = vmatpush1.msra.mxu0 0.0
        %874 = vmatprep.subr.mxu0 0.0
        %875 = vmatpush1.msra.mxu0 0.0
        %876 = vmatprep.subr.mxu0 0.0
        %877 = vmatpush1.msra.mxu0 %v848
        %878 = vmatprep.subr.mxu0 0.0
        %879 = vmatpush1.msra.mxu0 %v805
        %880 = vmatprep.subr.mxu0 0.0
        %881 = vmatpush1.msra.mxu0 %v804
        %882 = vmatprep.subr.mxu0 0.0
        %883 = vmatpush2.msra.mxu0 0.0
        %884 = vmatprep.subr.mxu0 0.0
        %885 = vmatpush2.msra.mxu0 0.0
        %886 = vmatprep.subr.mxu0 0.0
        %887 = vmatpush2.msra.mxu0 0.0
        %888 = vmatprep.subr.mxu0 0.0
        %889 = vmatpush2.msra.mxu0 0.0
        %890 = vmatprep.subr.mxu0 0.0
        %891 = vmatpush2.msra.mxu0 0.0
        %892 = vmatprep.subr.mxu0 0.0
        %893 = vmatpush2.msra.mxu0 0.0
        %894 = vmatprep.subr.mxu0 0.0
        %895 = vmatpush2.msra.mxu0 0.0
        %896 = vmatprep.subr.mxu0 0.0
        %897 = vmatpush2.msra.mxu0 0.0
        %898 = vmatprep.subr.mxu0 0.0
        %899 = vmatpush2.msra.mxu0 0.0
        %900 = vmatprep.subr.mxu0 0.0
        %901 = vmatpush2.msra.mxu0 0.0
        %902 = vmatprep.subr.mxu0 0.0
        %903 = vmatpush2.msra.mxu0 0.0
        %904 = vmatprep.subr.mxu0 0.0
        %905 = vmatpush2.msra.mxu0 0.0
        %906 = vmatprep.subr.mxu0 0.0
        %907 = vmatpush2.msra.mxu0 0.0
        %908 = vmatprep.subr.mxu0 0.0
        %909 = vmatpush2.msra.mxu0 0.0
        %910 = vmatprep.subr.mxu0 0.0
        %911 = vmatpush2.msra.mxu0 0.0
        %912 = vmatprep.subr.mxu0 0.0
        %913 = vmatpush2.msra.mxu0 0.0
        %914 = vmatprep.mubr.f32.mxu0 0.0
        %915 = vmatmul.mubr.f32.gmra.mxu0 %v836
        %v916 = vpop.f32.mrf.mxu0
        %v917 = vadd.f32 %v818, %v916
        %v918 = vpop.f32.mrf.mxu0
        %919 = vmatprep.mubr.f32.mxu0 0.0
        %920 = vmatmul.mubr.f32.gmra.mxu0 %v839
        %v921 = vpop.f32.mrf.mxu0
        %v922 = vadd.f32 %v823, %v921
        %v923 = vpop.f32.mrf.mxu0
        %924 = vmatprep.mubr.f32.mxu0 0.0
        %925 = vmatmul.mubr.f32.gmra.mxu0 %v842
        %v926 = vpop.f32.mrf.mxu0
        %v927 = vadd.f32 %v828, %v926
        %v928 = vpop.f32.mrf.mxu0
        %929 = vmatprep.mubr.f32.mxu0 0.0
        %930 = vmatmul.mubr.f32.gmra.mxu0 %v845
        %v931 = vpop.f32.mrf.mxu0
        %v932 = vadd.f32 %v833, %v931
        %v933 = vpop.f32.mrf.mxu0
        %934 = vdwg.mxu0
        %v935 = vmax.f32 %v917, 0.0
        %v936 = vmax.f32 %v922, 0.0
        %v937 = vmax.f32 %v927, 0.0
        %v938 = vmax.f32 %v932, 0.0
        %v939 = vld [vmem:[%s9] sm:$0xff]
        %v940 = vld [vmem:[%s9 + $0x8] sm:$0xff]
        %v941 = vld [vmem:[%s9 + $0x10] sm:$0xff]
        %v942 = vld [vmem:[%s9 + $0x18] sm:$0xff]
        %v943 = vld [vmem:[%s9 + $0x20] sm:$0x7f]
        %v944 = vld [vmem:[%s10] sm:$0xff]
        %v945 = vld [vmem:[%s10 + $0x8] sm:$0xff]
        %v946 = vld [vmem:[%s10 + $0x10] sm:$0xff]
        %v947 = vld [vmem:[%s10 + $0x18] sm:$0xff]
        %v948 = vld [vmem:[%s10 + $0x20] sm:$0x7f]
        %950 = vset.pattern.permute.xlu0 0
        %951 = vperm.xlu0 %950, %v944
        %v952 = vpop.permute.xlu0 %951
        %955 = vset.pattern.permute.xlu0 0
        %956 = vperm.xlu0 %955, %v945
        %v957 = vpop.permute.xlu0 %956
        %960 = vset.pattern.permute.xlu0 0
        %961 = vperm.xlu0 %960, %v946
        %v962 = vpop.permute.xlu0 %961
        %965 = vset.pattern.permute.xlu0 0
        %966 = vperm.xlu0 %965, %v947
        %v967 = vpop.permute.xlu0 %966
        %970 = vset.pattern.permute.xlu0 0
        %971 = vperm.xlu0 %970, %v948
        %v972 = vpop.permute.xlu0 %971
        %v975 = vsel %vm596, %v939, 0
        %v978 = vsel %vm596, %v940, 0
        %v981 = vsel %vm596, %v941, 0
        %v984 = vsel %vm596, %v942, 0
        %v987 = vsel %vm596, %v943, 0
        %989 = vmatprep.subr.mxu0 0.0
        %990 = vmatpush1.msra.mxu0 0.0
        %991 = vmatprep.subr.mxu0 0.0
        %992 = vmatpush1.msra.mxu0 0.0
        %993 = vmatprep.subr.mxu0 0.0
        %994 = vmatpush1.msra.mxu0 0.0
        %995 = vmatprep.subr.mxu0 0.0
        %996 = vmatpush1.msra.mxu0 0.0
        %997 = vmatprep.subr.mxu0 0.0
        %998 = vmatpush1.msra.mxu0 0.0
        %999 = vmatprep.subr.mxu0 0.0
        %1000 = vmatpush1.msra.mxu0 0.0
        %1001 = vmatprep.subr.mxu0 0.0
        %1002 = vmatpush1.msra.mxu0 0.0
        %1003 = vmatprep.subr.mxu0 0.0
        %1004 = vmatpush1.msra.mxu0 0.0
        %1005 = vmatprep.subr.mxu0 0.0
        %1006 = vmatpush1.msra.mxu0 0.0
        %1007 = vmatprep.subr.mxu0 0.0
        %1008 = vmatpush1.msra.mxu0 0.0
        %1009 = vmatprep.subr.mxu0 0.0
        %1010 = vmatpush1.msra.mxu0 0.0
        %1011 = vmatprep.subr.mxu0 0.0
        %1012 = vmatpush1.msra.mxu0 0.0
        %1013 = vmatprep.subr.mxu0 0.0
        %1014 = vmatpush1.msra.mxu0 %v938
        %1015 = vmatprep.subr.mxu0 0.0
        %1016 = vmatpush1.msra.mxu0 %v937
        %1017 = vmatprep.subr.mxu0 0.0
        %1018 = vmatpush1.msra.mxu0 %v936
        %1019 = vmatprep.subr.mxu0 0.0
        %1020 = vmatpush1.msra.mxu0 %v935
        %1021 = vmatprep.subr.mxu0 0.0
        %1022 = vmatpush2.msra.mxu0 0.0
        %1023 = vmatprep.subr.mxu0 0.0
        %1024 = vmatpush2.msra.mxu0 0.0
        %1025 = vmatprep.subr.mxu0 0.0
        %1026 = vmatpush2.msra.mxu0 0.0
        %1027 = vmatprep.subr.mxu0 0.0
        %1028 = vmatpush2.msra.mxu0 0.0
        %1029 = vmatprep.subr.mxu0 0.0
        %1030 = vmatpush2.msra.mxu0 0.0
        %1031 = vmatprep.subr.mxu0 0.0
        %1032 = vmatpush2.msra.mxu0 0.0
        %1033 = vmatprep.subr.mxu0 0.0
        %1034 = vmatpush2.msra.mxu0 0.0
        %1035 = vmatprep.subr.mxu0 0.0
        %1036 = vmatpush2.msra.mxu0 0.0
        %1037 = vmatprep.subr.mxu0 0.0
        %1038 = vmatpush2.msra.mxu0 0.0
        %1039 = vmatprep.subr.mxu0 0.0
        %1040 = vmatpush2.msra.mxu0 0.0
        %1041 = vmatprep.subr.mxu0 0.0
        %1042 = vmatpush2.msra.mxu0 0.0
        %1043 = vmatprep.subr.mxu0 0.0
        %1044 = vmatpush2.msra.mxu0 0.0
        %1045 = vmatprep.subr.mxu0 0.0
        %1046 = vmatpush2.msra.mxu0 0.0
        %1047 = vmatprep.subr.mxu0 0.0
        %1048 = vmatpush2.msra.mxu0 0.0
        %1049 = vmatprep.subr.mxu0 0.0
        %1050 = vmatpush2.msra.mxu0 0.0
        %1051 = vmatprep.subr.mxu0 0.0
        %1052 = vmatpush2.msra.mxu0 0.0
        %1053 = vmatprep.mubr.f32.mxu0 0.0
        %1054 = vmatmul.mubr.f32.gmra.mxu0 %v975
        %v1055 = vpop.f32.mrf.mxu0
        %v1056 = vadd.f32 %v952, %v1055
        %v1057 = vpop.f32.mrf.mxu0
        %1058 = vmatprep.mubr.f32.mxu0 0.0
        %1059 = vmatmul.mubr.f32.gmra.mxu0 %v978
        %v1060 = vpop.f32.mrf.mxu0
        %v1061 = vadd.f32 %v957, %v1060
        %v1062 = vpop.f32.mrf.mxu0
        %1063 = vmatprep.mubr.f32.mxu0 0.0
        %1064 = vmatmul.mubr.f32.gmra.mxu0 %v981
        %v1065 = vpop.f32.mrf.mxu0
        %v1066 = vadd.f32 %v962, %v1065
        %v1067 = vpop.f32.mrf.mxu0
        %1068 = vmatprep.mubr.f32.mxu0 0.0
        %1069 = vmatmul.mubr.f32.gmra.mxu0 %v984
        %v1070 = vpop.f32.mrf.mxu0
        %v1071 = vadd.f32 %v967, %v1070
        %v1072 = vpop.f32.mrf.mxu0
        %1073 = vmatprep.mubr.f32.mxu0 0.0
        %1074 = vmatmul.mubr.f32.gmra.mxu0 %v987
        %v1075 = vpop.f32.mrf.mxu0
        %v1076 = vadd.f32 %v972, %v1075
        %v1077 = vpop.f32.mrf.mxu0
        %1078 = vdwg.mxu0
        %1079 = vst [vmem:[%s435] sm:$0xff] %v1056
        %1080 = vst [vmem:[%s435 + $0x8] sm:$0xff] %v1061
        %1081 = vst [vmem:[%s435 + $0x10] sm:$0xff] %v1066
        %1082 = vst [vmem:[%s435 + $0x18] sm:$0xff] %v1071
        %1083 = vst [vmem:[%s435 + $0x20] sm:$0x7f] %v1076
        %s1084 = sand.u32 %s269, 1
        %s1085 = scalar_lea.sflag [#allocation4], %s1084
        %s1086 = sand.u32 %s269, 1
        %s1087 = smul.addr %s1086, 40
        %s1088 = scalar_lea.vmem [#allocation3], %s1087
        // Predicated region
        $region103: #{tpu_custom_call.1} parent=97 // pred_check
          %p1089 = pneg %p279
        $region104: #{tpu_custom_call.1} parent=97 // pred_check_branch
          %1091 = sbr.rel (%p1089) target = $region106
        $region105: #{tpu_custom_call.1} parent=97 // pred_region
          %s1093 = ssub.s32 640, 640
          %1094 = vsyncadd %s1085, %s1093
          %s1095 = smul.addr %s25, 128
          %s1096 = scalar_lea.hbm %s11, %s1095
          %s1097 = sshll.u32 %s1088, 4
          %s1098 = int_to_ptr.vmem [resolvable:$true] %s1097
          %1103 = dma.vmem_to_hbm [thread:$0]  %s1098, 640, %s1096, %s1085, 128, 384, 8
        $region106: #{tpu_custom_call.1} parent=97 // pred_fallthru
          _
      $region98: #{tpu_custom_call.1} parent=5 // pred_fallthru
        _
      %p1104 = scmp.le.s32.totalorder 2, %s20
      // Predicated region
      $region107: #{tpu_custom_call.1} parent=5 // pred_check
        %p1105 = pneg %p1104
      $region108: #{tpu_custom_call.1} parent=5 // pred_check_branch
        %1107 = sbr.rel (%p1105) target = $region110
      $region109: #{tpu_custom_call.1} parent=5 // pred_region
        %s1108 = ssub.s32 %s20, 2
        // Predicated region
        $region111: #{tpu_custom_call.1} parent=109 // pred_check
          %p1109 = pneg %p285
        $region112: #{tpu_custom_call.1} parent=109 // pred_check_branch
          %1111 = sbr.rel (%p1109) target = $region114
        $region113: #{tpu_custom_call.1} parent=109 // pred_region
          %s1112 = sand.u32 %s270, 1
          %s1113 = scalar_lea.sflag [#allocation4], %s1112
          %s1114 = sand.u32 %s270, 1
          %s1115 = smul.addr %s1114, 40
          %s1116 = scalar_lea.vmem [#allocation3], %s1115
          %1117 = dma.done %s1113, 640
        $region114: #{tpu_custom_call.1} parent=109 // pred_fallthru
          _
      $region110: #{tpu_custom_call.1} parent=5 // pred_fallthru
        _
    $region6: #{tpu_custom_call.1} parent=1 // loop_footer
      %s24 = sadd.s32 1, %s20
    $region7: #{tpu_custom_call.1} parent=1 // loop_footer_branch
      %19 = sbr.rel target = $region3
    $region8: #{tpu_custom_call.1} parent=1 // loop_exit
      _
    %1118 = vsyncpa [#allocation4], 1
    %s1119 = scalar_lea.sflag [#allocation4], 1
    %1120 = vsyncpa %s1119, 1

</llo_original>
